<compile_context>
chip_gen: v5e
topology: v5e:2x2
jax: 0.10.0
libtpu: 0.0.40
codegen_flags: <defaults>
</compile_context>

<pallas_src>
import jax
import jax.numpy as jnp
from jax.experimental import pallas as pl
from jax.experimental.pallas import tpu as pltpu

EPS = 1e-5


# ----------------------------------------------------------------------------
# Fused kernel factory
# ----------------------------------------------------------------------------
def _make_fused_kernel(emb_szs, n_cont, layer_sizes, last_is_reduce):
    n_cat = len(emb_szs)
    n_layers = len(layer_sizes) - 1

    def kernel(*refs):
        it = iter(refs)
        xcat_ref = next(it)            # [n_cat, bt]  int32
        xcont_ref = next(it)           # [n_cont, bt] f32
        cont_scale_ref = next(it)      # [n_cont, 1]
        cont_shift_ref = next(it)      # [n_cont, 1]
        emb_refs = [next(it) for _ in range(n_cat)]        # [nf_c, nv_c]
        w0_refs = [next(it) for _ in range(n_cat + 1)]     # [h1, nf_c]..., [h1, n_cont]
        b0_ref = next(it)                                  # [h1, 1]
        hidden_refs = [tuple(next(it) for _ in range(4))   # (scale, shift, w, b)
                       for _ in range(n_layers - 1)]
        out_ref = next(it)                                 # [out_sz, bt]

        bt = xcont_ref.shape[-1]

        # ---- layer 0: embeddings (one-hot matmul on resident VMEM tables) +
        #      bn_cont affine + Linear(n_emb + n_cont -> h1) + ReLU -------------
        y = b0_ref[...]                                    # [h1, 1] -> broadcasts over lanes
        for c in range(n_cat):
            nv = emb_szs[c][0]
            idx = xcat_ref[c:c + 1, :]                                   # [1, bt]
            iota = jax.lax.broadcasted_iota(jnp.int32, (nv, bt), 0)
            onehot = (iota == idx).astype(jnp.float32)                   # [nv, bt]
            e_c = jnp.dot(emb_refs[c][...], onehot,
                          preferred_element_type=jnp.float32)            # [nf_c, bt]
            y = y + jnp.dot(w0_refs[c][...], e_c,
                            preferred_element_type=jnp.float32)          # [h1, bt]
        cont = xcont_ref[...] * cont_scale_ref[...] + cont_shift_ref[...]  # bn_cont
        y = y + jnp.dot(w0_refs[n_cat][...], cont,
                        preferred_element_type=jnp.float32)
        x = jnp.maximum(y, 0.0)

        # ---- layers 1..L-1: BN -> Dropout(0) -> Linear -> ReLU (no ReLU on last) ----
        for li in range(1, n_layers):
            scale_ref, shift_ref, w_ref, b_ref = hidden_refs[li - 1]
            xn = x * scale_ref[...] + shift_ref[...]
            is_last = li == n_layers - 1
            if is_last and last_is_reduce:
                # out_sz == 1: VPU multiply + sublane reduce (XLU) instead of an
                # N=1 MXU pass.  w_ref is stored pre-transposed as [n_in, 1].
                y = jnp.sum(w_ref[...] * xn, axis=0, keepdims=True) + b_ref[...]
            else:
                y = jnp.dot(w_ref[...], xn,
                            preferred_element_type=jnp.float32) + b_ref[...]
            if not is_last:
                y = jnp.maximum(y, 0.0)
            x = y

        # y_range is None -> no range rescale; forward() applies sigmoid after squeeze
        # (elementwise, order-invariant), fused here so the store is already final.
        out_ref[...] = jax.nn.sigmoid(x).astype(out_ref.dtype)

    return kernel


# ----------------------------------------------------------------------------
# Wrapper: one pallas_call for the whole forward
# ----------------------------------------------------------------------------
def tabular_forward(params, x_cat, x_cont, batch_tile=128):
    emb_szs = params["emb_szs"]
    n_cont = params["n_cont"]
    layer_sizes = params["layer_sizes"]
    out_sz = layer_sizes[-1]
    n_cat = len(emb_szs)

    batch = x_cat.shape[0]
    b_pad = ((batch + batch_tile - 1) // batch_tile) * batch_tile

    # Feature-major layout: batch rides the 128-lane axis.  Pad rows with index 0
    # (valid) / zeros; padded lanes are sliced off after the kernel.
    x_cat_t = jnp.pad(x_cat.astype(jnp.int32), ((0, b_pad - batch), (0, 0))).T
    x_cont_t = jnp.pad(x_cont.astype(jnp.float32), ((0, b_pad - batch), (0, 0))).T

    param_arrays = ([params["cont_scale"], params["cont_shift"]]
                    + list(params["embTs"])
                    + list(params["w0_slices"]) + [params["b0"]])
    for lyr in params["hidden"]:
        param_arrays += [lyr["scale"], lyr["shift"], lyr["w"], lyr["b"]]

    kernel = _make_fused_kernel(emb_szs, n_cont, layer_sizes, params["last_is_reduce"])

    grid = (b_pad // batch_tile,)
    in_specs = ([pl.BlockSpec((n_cat, batch_tile), lambda i: (0, i)),
                 pl.BlockSpec((n_cont, batch_tile), lambda i: (0, i))]
                # parameters: same (full) block every grid step -> resident in VMEM
                + [pl.BlockSpec(p.shape, lambda i: (0, 0)) for p in param_arrays])
    out_specs = pl.BlockSpec((out_sz, batch_tile), lambda i: (0, i))  # lane-dense store

    out = pl.pallas_call(
        kernel,
        grid=grid,
        out_shape=jax.ShapeDtypeStruct((out_sz, b_pad), jnp.float32),
        in_specs=in_specs,
        out_specs=out_specs,
        compiler_params=pltpu.CompilerParams(
            dimension_semantics=("parallel",)),
    )(x_cat_t, x_cont_t, *param_arrays)

    out = out[:, :batch]
    # torch: x.squeeze() then sigmoid (sigmoid already fused in the kernel).
    return jnp.squeeze(out.T)


# ----------------------------------------------------------------------------
# Parameter construction (deterministic, synthetic, inference-mode BN)
# ----------------------------------------------------------------------------
def make_bn_affine(key, n):
    k1, k2, k3, k4 = jax.random.split(key, 4)
    gamma = 1.0 + 0.1 * jax.random.normal(k1, (n,), jnp.float32)
    beta = 0.1 * jax.random.normal(k2, (n,), jnp.float32)
    running_mean = 0.1 * jax.random.normal(k3, (n,), jnp.float32)
    running_var = jnp.abs(1.0 + 0.1 * jax.random.normal(k4, (n,), jnp.float32))
    scale = gamma / jnp.sqrt(running_var + EPS)
    shift = beta - running_mean * scale
    return scale.reshape(n, 1), shift.reshape(n, 1)


def make_linear(key, n_in, n_out):
    # PyTorch nn.Linear default init; weight stored torch-style [n_out, n_in].
    k1, k2 = jax.random.split(key)
    bound = 1.0 / float(n_in) ** 0.5
    w = jax.random.uniform(k1, (n_out, n_in), jnp.float32, -bound, bound)
    b = jax.random.uniform(k2, (n_out, 1), jnp.float32, -bound, bound)
    return w, b


def build_tabular_params(key, emb_szs, n_cont, out_sz, layers):
    assert len(layers) >= 1
    n_cat = len(emb_szs)
    n_emb = sum(nf for _, nf in emb_szs)
    layer_sizes = [n_emb + n_cont] + list(layers) + [out_sz]
    n_layers = len(layer_sizes) - 1

    keys = jax.random.split(key, n_cat + 2 + 2 * n_layers)
    ki = iter(keys)

    # nn.Embedding default init N(0,1); stored transposed [nf, vocab].
    embTs = [jax.random.normal(next(ki), (nf, nv), jnp.float32) for nv, nf in emb_szs]

    # bn_cont (BatchNorm1d over continuous features), running-stats affine.
    cont_scale, cont_shift = make_bn_affine(next(ki), n_cont)

    # Layer 0: no BN (use_bn and i != 0).  Linear weight split column-wise per input
    # block (each embedding + continuous) so the kernel never concatenates features.
    w0, b0 = make_linear(next(ki), layer_sizes[0], layer_sizes[1])
    splits = [nf for _, nf in emb_szs] + [n_cont]
    w0_slices, off = [], 0
    for s in splits:
        w0_slices.append(w0[:, off:off + s])
        off += s

    hidden = []
    last_is_reduce = out_sz == 1
    for li in range(1, n_layers):
        n_in, n_out = layer_sizes[li], layer_sizes[li + 1]
        scale, shift = make_bn_affine(next(ki), n_in)
        w, b = make_linear(next(ki), n_in, n_out)
        if li == n_layers - 1 and last_is_reduce:
            w = w.T  # stored [n_in, 1] for the VPU-mul + sublane-reduce path
        hidden.append(dict(scale=scale, shift=shift, w=w, b=b))

    return dict(emb_szs=emb_szs, n_cont=n_cont, layer_sizes=layer_sizes,
                embTs=embTs, cont_scale=cont_scale, cont_shift=cont_shift,
                w0_slices=w0_slices, b0=b0, hidden=hidden,
                last_is_reduce=last_is_reduce)


# ----------------------------------------------------------------------------
# Pure-JAX reference (standard [batch, feature] math) for correctness checking
# ----------------------------------------------------------------------------
def tabular_forward_ref(params, x_cat, x_cont):
    layer_sizes = params["layer_sizes"]
    n_layers = len(layer_sizes) - 1
    emb = [jnp.take(eT.T, x_cat[:, c], axis=0) for c, eT in enumerate(params["embTs"])]
    x = jnp.concatenate(emb, axis=1)
    cont = x_cont * params["cont_scale"].T + params["cont_shift"].T
    x = jnp.concatenate([x, cont], axis=1)
    w0 = jnp.concatenate(params["w0_slices"], axis=1)
    x = jnp.maximum(x @ w0.T + params["b0"].T, 0.0)
    for li in range(1, n_layers):
        lyr = params["hidden"][li - 1]
        xn = x * lyr["scale"].T + lyr["shift"].T
        is_last = li == n_layers - 1
        if is_last and params["last_is_reduce"]:
            y = xn @ lyr["w"] + lyr["b"].T          # w stored [n_in, 1]
        else:
            y = xn @ lyr["w"].T + lyr["b"].T
        if not is_last:
            y = jnp.maximum(y, 0.0)
        x = y
    return jax.nn.sigmoid(jnp.squeeze(x))


if __name__ == "__main__":
    key = jax.random.PRNGKey(0)
    k_params, k_cat, k_cont = jax.random.split(key, 3)

    # Small, module-consistent configuration.
    emb_szs = [(10, 4), (8, 3)]      # two categorical columns -> n_emb = 7
    n_cont = 5
    out_sz = 1
    hidden_layers = [32, 16]
    batch = 8

    params = build_tabular_params(k_params, emb_szs, n_cont, out_sz, hidden_layers)

    x_cat = jnp.stack(
        [jax.random.randint(jax.random.fold_in(k_cat, i), (batch,), 0, nv)
         for i, (nv, _) in enumerate(emb_szs)], axis=1).astype(jnp.int32)   # [8, 2]
    x_cont = jax.random.normal(k_cont, (batch, n_cont), jnp.float32)        # [8, 5]

    out = jax.block_until_ready(tabular_forward(params, x_cat, x_cont))
    ref = tabular_forward_ref(params, x_cat, x_cont)

    assert out.shape == (batch,)
    assert jnp.allclose(out, ref, atol=1e-5, rtol=1e-5)

    print("KERNEL_OK")
</pallas_src>

<mosaic_0001>
module attributes {stable_mosaic.version = 11 : i64} {
  func.func @kernel(%arg0: i32, %arg1: memref<2x128xi32, #tpu.memory_space<vmem>>, %arg2: memref<5x128xf32, #tpu.memory_space<vmem>>, %arg3: memref<5x1xf32, #tpu.memory_space<vmem>>, %arg4: memref<5x1xf32, #tpu.memory_space<vmem>>, %arg5: memref<4x10xf32, #tpu.memory_space<vmem>>, %arg6: memref<3x8xf32, #tpu.memory_space<vmem>>, %arg7: memref<32x4xf32, #tpu.memory_space<vmem>>, %arg8: memref<32x3xf32, #tpu.memory_space<vmem>>, %arg9: memref<32x5xf32, #tpu.memory_space<vmem>>, %arg10: memref<32x1xf32, #tpu.memory_space<vmem>>, %arg11: memref<32x1xf32, #tpu.memory_space<vmem>>, %arg12: memref<32x1xf32, #tpu.memory_space<vmem>>, %arg13: memref<16x32xf32, #tpu.memory_space<vmem>>, %arg14: memref<16x1xf32, #tpu.memory_space<vmem>>, %arg15: memref<16x1xf32, #tpu.memory_space<vmem>>, %arg16: memref<16x1xf32, #tpu.memory_space<vmem>>, %arg17: memref<16x1xf32, #tpu.memory_space<vmem>>, %arg18: memref<1x1xf32, #tpu.memory_space<vmem>>, %arg19: memref<1x128xf32, #tpu.memory_space<vmem>>) attributes {dimension_semantics = [#tpu.dimension_semantics<parallel>], iteration_bounds = array<i64: 1>, scalar_prefetch = 0 : i64, scratch_operands = 0 : i64, tpu.core_type = #tpu.core_type<tc>, window_params = [{transform_indices = @transform_0, window_bounds = array<i64: 2, 128>}, {transform_indices = @transform_1, window_bounds = array<i64: 5, 128>}, {pipeline_mode = #tpu.pipeline_mode<synchronous>, transform_indices = @transform_2, window_bounds = array<i64: 5, 1>}, {pipeline_mode = #tpu.pipeline_mode<synchronous>, transform_indices = @transform_3, window_bounds = array<i64: 5, 1>}, {pipeline_mode = #tpu.pipeline_mode<synchronous>, transform_indices = @transform_4, window_bounds = array<i64: 4, 10>}, {pipeline_mode = #tpu.pipeline_mode<synchronous>, transform_indices = @transform_5, window_bounds = array<i64: 3, 8>}, {pipeline_mode = #tpu.pipeline_mode<synchronous>, transform_indices = @transform_6, window_bounds = array<i64: 32, 4>}, {pipeline_mode = #tpu.pipeline_mode<synchronous>, transform_indices = @transform_7, window_bounds = array<i64: 32, 3>}, {pipeline_mode = #tpu.pipeline_mode<synchronous>, transform_indices = @transform_8, window_bounds = array<i64: 32, 5>}, {pipeline_mode = #tpu.pipeline_mode<synchronous>, transform_indices = @transform_9, window_bounds = array<i64: 32, 1>}, {pipeline_mode = #tpu.pipeline_mode<synchronous>, transform_indices = @transform_10, window_bounds = array<i64: 32, 1>}, {pipeline_mode = #tpu.pipeline_mode<synchronous>, transform_indices = @transform_11, window_bounds = array<i64: 32, 1>}, {pipeline_mode = #tpu.pipeline_mode<synchronous>, transform_indices = @transform_12, window_bounds = array<i64: 16, 32>}, {pipeline_mode = #tpu.pipeline_mode<synchronous>, transform_indices = @transform_13, window_bounds = array<i64: 16, 1>}, {pipeline_mode = #tpu.pipeline_mode<synchronous>, transform_indices = @transform_14, window_bounds = array<i64: 16, 1>}, {pipeline_mode = #tpu.pipeline_mode<synchronous>, transform_indices = @transform_15, window_bounds = array<i64: 16, 1>}, {pipeline_mode = #tpu.pipeline_mode<synchronous>, transform_indices = @transform_16, window_bounds = array<i64: 16, 1>}, {pipeline_mode = #tpu.pipeline_mode<synchronous>, transform_indices = @transform_17, window_bounds = array<i64: 1, 1>}, {transform_indices = @transform_18, window_bounds = array<i64: 1, 128>}]} {
    %c0 = arith.constant 0 : index
    %c0_0 = arith.constant 0 : index
    %0 = vector.load %arg10[%c0, %c0_0] : memref<32x1xf32, #tpu.memory_space<vmem>>, vector<32x1xf32>
    %c0_1 = arith.constant 0 : index
    %c0_2 = arith.constant 0 : index
    %1 = vector.load %arg1[%c0_1, %c0_2] : memref<2x128xi32, #tpu.memory_space<vmem>>, vector<1x128xi32>
    %2 = tpu.iota {dimensions = array<i32: 0>} : vector<10x128xi32>
    %3 = vector.broadcast %1 : vector<1x128xi32> to vector<10x128xi32>
    %4 = arith.cmpi eq, %2, %3 : vector<10x128xi32>
    %5 = arith.extui %4 : vector<10x128xi1> to vector<10x128xi32>
    %6 = arith.sitofp %5 : vector<10x128xi32> to vector<10x128xf32>
    %c0_3 = arith.constant 0 : index
    %c0_4 = arith.constant 0 : index
    %7 = vector.load %arg5[%c0_3, %c0_4] : memref<4x10xf32, #tpu.memory_space<vmem>>, vector<4x10xf32>
    %cst = arith.constant dense<0.000000e+00> : vector<4x128xf32>
    %8 = tpu.matmul %7, %6, %cst {dimension_numbers = #tpu.dot_dimension_numbers<[1], [0], [0], [1], [0, 0, 1, 1], [], []>} : vector<4x10xf32>, vector<10x128xf32>, vector<4x128xf32> -> vector<4x128xf32>
    %c0_5 = arith.constant 0 : index
    %c0_6 = arith.constant 0 : index
    %9 = vector.load %arg7[%c0_5, %c0_6] : memref<32x4xf32, #tpu.memory_space<vmem>>, vector<32x4xf32>
    %cst_7 = arith.constant dense<0.000000e+00> : vector<32x128xf32>
    %10 = tpu.matmul %9, %8, %cst_7 {dimension_numbers = #tpu.dot_dimension_numbers<[1], [0], [0], [1], [0, 0, 1, 1], [], []>} : vector<32x4xf32>, vector<4x128xf32>, vector<32x128xf32> -> vector<32x128xf32>
    %11 = vector.broadcast %0 : vector<32x1xf32> to vector<32x128xf32>
    %12 = arith.addf %11, %10 : vector<32x128xf32>
    %c1 = arith.constant 1 : index
    %c0_8 = arith.constant 0 : index
    %13 = vector.load %arg1[%c1, %c0_8] : memref<2x128xi32, #tpu.memory_space<vmem>>, vector<1x128xi32>
    %14 = tpu.iota {dimensions = array<i32: 0>} : vector<8x128xi32>
    %15 = vector.broadcast %13 : vector<1x128xi32> to vector<8x128xi32>
    %16 = arith.cmpi eq, %14, %15 : vector<8x128xi32>
    %17 = arith.extui %16 : vector<8x128xi1> to vector<8x128xi32>
    %18 = arith.sitofp %17 : vector<8x128xi32> to vector<8x128xf32>
    %c0_9 = arith.constant 0 : index
    %c0_10 = arith.constant 0 : index
    %19 = vector.load %arg6[%c0_9, %c0_10] : memref<3x8xf32, #tpu.memory_space<vmem>>, vector<3x8xf32>
    %cst_11 = arith.constant dense<0.000000e+00> : vector<3x128xf32>
    %20 = tpu.matmul %19, %18, %cst_11 {dimension_numbers = #tpu.dot_dimension_numbers<[1], [0], [0], [1], [0, 0, 1, 1], [], []>} : vector<3x8xf32>, vector<8x128xf32>, vector<3x128xf32> -> vector<3x128xf32>
    %c0_12 = arith.constant 0 : index
    %c0_13 = arith.constant 0 : index
    %21 = vector.load %arg8[%c0_12, %c0_13] : memref<32x3xf32, #tpu.memory_space<vmem>>, vector<32x3xf32>
    %cst_14 = arith.constant dense<0.000000e+00> : vector<32x128xf32>
    %22 = tpu.matmul %21, %20, %cst_14 {dimension_numbers = #tpu.dot_dimension_numbers<[1], [0], [0], [1], [0, 0, 1, 1], [], []>} : vector<32x3xf32>, vector<3x128xf32>, vector<32x128xf32> -> vector<32x128xf32>
    %23 = arith.addf %12, %22 : vector<32x128xf32>
    %c0_15 = arith.constant 0 : index
    %c0_16 = arith.constant 0 : index
    %24 = vector.load %arg2[%c0_15, %c0_16] : memref<5x128xf32, #tpu.memory_space<vmem>>, vector<5x128xf32>
    %c0_17 = arith.constant 0 : index
    %c0_18 = arith.constant 0 : index
    %25 = vector.load %arg3[%c0_17, %c0_18] : memref<5x1xf32, #tpu.memory_space<vmem>>, vector<5x1xf32>
    %26 = vector.broadcast %25 : vector<5x1xf32> to vector<5x128xf32>
    %27 = arith.mulf %24, %26 : vector<5x128xf32>
    %c0_19 = arith.constant 0 : index
    %c0_20 = arith.constant 0 : index
    %28 = vector.load %arg4[%c0_19, %c0_20] : memref<5x1xf32, #tpu.memory_space<vmem>>, vector<5x1xf32>
    %29 = vector.broadcast %28 : vector<5x1xf32> to vector<5x128xf32>
    %30 = arith.addf %27, %29 : vector<5x128xf32>
    %c0_21 = arith.constant 0 : index
    %c0_22 = arith.constant 0 : index
    %31 = vector.load %arg9[%c0_21, %c0_22] : memref<32x5xf32, #tpu.memory_space<vmem>>, vector<32x5xf32>
    %cst_23 = arith.constant dense<0.000000e+00> : vector<32x128xf32>
    %32 = tpu.matmul %31, %30, %cst_23 {dimension_numbers = #tpu.dot_dimension_numbers<[1], [0], [0], [1], [0, 0, 1, 1], [], []>} : vector<32x5xf32>, vector<5x128xf32>, vector<32x128xf32> -> vector<32x128xf32>
    %33 = arith.addf %23, %32 : vector<32x128xf32>
    %cst_24 = arith.constant 0.000000e+00 : f32
    %34 = vector.broadcast %cst_24 : f32 to vector<32x128xf32>
    %35 = arith.maximumf %33, %34 : vector<32x128xf32>
    %c0_25 = arith.constant 0 : index
    %c0_26 = arith.constant 0 : index
    %36 = vector.load %arg11[%c0_25, %c0_26] : memref<32x1xf32, #tpu.memory_space<vmem>>, vector<32x1xf32>
    %37 = vector.broadcast %36 : vector<32x1xf32> to vector<32x128xf32>
    %38 = arith.mulf %35, %37 : vector<32x128xf32>
    %c0_27 = arith.constant 0 : index
    %c0_28 = arith.constant 0 : index
    %39 = vector.load %arg12[%c0_27, %c0_28] : memref<32x1xf32, #tpu.memory_space<vmem>>, vector<32x1xf32>
    %40 = vector.broadcast %39 : vector<32x1xf32> to vector<32x128xf32>
    %41 = arith.addf %38, %40 : vector<32x128xf32>
    %c0_29 = arith.constant 0 : index
    %c0_30 = arith.constant 0 : index
    %42 = vector.load %arg13[%c0_29, %c0_30] : memref<16x32xf32, #tpu.memory_space<vmem>>, vector<16x32xf32>
    %cst_31 = arith.constant dense<0.000000e+00> : vector<16x128xf32>
    %43 = tpu.matmul %42, %41, %cst_31 {dimension_numbers = #tpu.dot_dimension_numbers<[1], [0], [0], [1], [0, 0, 1, 1], [], []>} : vector<16x32xf32>, vector<32x128xf32>, vector<16x128xf32> -> vector<16x128xf32>
    %c0_32 = arith.constant 0 : index
    %c0_33 = arith.constant 0 : index
    %44 = vector.load %arg14[%c0_32, %c0_33] : memref<16x1xf32, #tpu.memory_space<vmem>>, vector<16x1xf32>
    %45 = vector.broadcast %44 : vector<16x1xf32> to vector<16x128xf32>
    %46 = arith.addf %43, %45 : vector<16x128xf32>
    %cst_34 = arith.constant 0.000000e+00 : f32
    %47 = vector.broadcast %cst_34 : f32 to vector<16x128xf32>
    %48 = arith.maximumf %46, %47 : vector<16x128xf32>
    %c0_35 = arith.constant 0 : index
    %c0_36 = arith.constant 0 : index
    %49 = vector.load %arg15[%c0_35, %c0_36] : memref<16x1xf32, #tpu.memory_space<vmem>>, vector<16x1xf32>
    %50 = vector.broadcast %49 : vector<16x1xf32> to vector<16x128xf32>
    %51 = arith.mulf %48, %50 : vector<16x128xf32>
    %c0_37 = arith.constant 0 : index
    %c0_38 = arith.constant 0 : index
    %52 = vector.load %arg16[%c0_37, %c0_38] : memref<16x1xf32, #tpu.memory_space<vmem>>, vector<16x1xf32>
    %53 = vector.broadcast %52 : vector<16x1xf32> to vector<16x128xf32>
    %54 = arith.addf %51, %53 : vector<16x128xf32>
    %c0_39 = arith.constant 0 : index
    %c0_40 = arith.constant 0 : index
    %55 = vector.load %arg17[%c0_39, %c0_40] : memref<16x1xf32, #tpu.memory_space<vmem>>, vector<16x1xf32>
    %56 = vector.broadcast %55 : vector<16x1xf32> to vector<16x128xf32>
    %57 = arith.mulf %56, %54 : vector<16x128xf32>
    %cst_41 = arith.constant dense<0.000000e+00> : vector<128xf32>
    %58 = vector.multi_reduction <add>, %57, %cst_41 [0] : vector<16x128xf32> to vector<128xf32>
    %59 = vector.shape_cast %58 : vector<128xf32> to vector<1x128xf32>
    %c0_42 = arith.constant 0 : index
    %c0_43 = arith.constant 0 : index
    %60 = vector.load %arg18[%c0_42, %c0_43] : memref<1x1xf32, #tpu.memory_space<vmem>>, vector<1x1xf32>
    %61 = vector.broadcast %60 : vector<1x1xf32> to vector<1x128xf32>
    %62 = arith.addf %59, %61 : vector<1x128xf32>
    %63 = arith.negf %62 : vector<1x128xf32>
    %64 = math.exp %63 : vector<1x128xf32>
    %cst_44 = arith.constant 1.000000e+00 : f32
    %65 = vector.broadcast %cst_44 : f32 to vector<1x128xf32>
    %66 = arith.addf %65, %64 : vector<1x128xf32>
    %67 = arith.divf %65, %66 : vector<1x128xf32>
    %c0_45 = arith.constant 0 : index
    %c0_46 = arith.constant 0 : index
    %68 = vector.load %arg19[%c0_45, %c0_46] : memref<1x128xf32, #tpu.memory_space<vmem>>, vector<1x128xf32>
    tpu.vector_store %arg19[%c0_45, %c0_46], %67 {strides = array<i32>} : memref<1x128xf32, #tpu.memory_space<vmem>>, vector<1x128xf32>,
    return
  }
  func.func @transform_0(%arg0: i32) -> (i32, i32) {
    %c0_i32 = arith.constant 0 : i32
    %c0_i32_0 = arith.constant 0 : i32
    return %c0_i32, %arg0 : i32, i32
  }
  func.func @transform_1(%arg0: i32) -> (i32, i32) {
    %c0_i32 = arith.constant 0 : i32
    %c0_i32_0 = arith.constant 0 : i32
    return %c0_i32, %arg0 : i32, i32
  }
  func.func @transform_2(%arg0: i32) -> (i32, i32) {
    %c0_i32 = arith.constant 0 : i32
    %c0_i32_0 = arith.constant 0 : i32
    %c0_i32_1 = arith.constant 0 : i32
    return %c0_i32, %c0_i32_0 : i32, i32
  }
  func.func @transform_3(%arg0: i32) -> (i32, i32) {
    %c0_i32 = arith.constant 0 : i32
    %c0_i32_0 = arith.constant 0 : i32
    %c0_i32_1 = arith.constant 0 : i32
    return %c0_i32, %c0_i32_0 : i32, i32
  }
  func.func @transform_4(%arg0: i32) -> (i32, i32) {
    %c0_i32 = arith.constant 0 : i32
    %c0_i32_0 = arith.constant 0 : i32
    %c0_i32_1 = arith.constant 0 : i32
    return %c0_i32, %c0_i32_0 : i32, i32
  }
  func.func @transform_5(%arg0: i32) -> (i32, i32) {
    %c0_i32 = arith.constant 0 : i32
    %c0_i32_0 = arith.constant 0 : i32
    %c0_i32_1 = arith.constant 0 : i32
    return %c0_i32, %c0_i32_0 : i32, i32
  }
  func.func @transform_6(%arg0: i32) -> (i32, i32) {
    %c0_i32 = arith.constant 0 : i32
    %c0_i32_0 = arith.constant 0 : i32
    %c0_i32_1 = arith.constant 0 : i32
    return %c0_i32, %c0_i32_0 : i32, i32
  }
  func.func @transform_7(%arg0: i32) -> (i32, i32) {
    %c0_i32 = arith.constant 0 : i32
    %c0_i32_0 = arith.constant 0 : i32
    %c0_i32_1 = arith.constant 0 : i32
    return %c0_i32, %c0_i32_0 : i32, i32
  }
  func.func @transform_8(%arg0: i32) -> (i32, i32) {
    %c0_i32 = arith.constant 0 : i32
    %c0_i32_0 = arith.constant 0 : i32
    %c0_i32_1 = arith.constant 0 : i32
    return %c0_i32, %c0_i32_0 : i32, i32
  }
  func.func @transform_9(%arg0: i32) -> (i32, i32) {
    %c0_i32 = arith.constant 0 : i32
    %c0_i32_0 = arith.constant 0 : i32
    %c0_i32_1 = arith.constant 0 : i32
    return %c0_i32, %c0_i32_0 : i32, i32
  }
  func.func @transform_10(%arg0: i32) -> (i32, i32) {
    %c0_i32 = arith.constant 0 : i32
    %c0_i32_0 = arith.constant 0 : i32
    %c0_i32_1 = arith.constant 0 : i32
    return %c0_i32, %c0_i32_0 : i32, i32
  }
  func.func @transform_11(%arg0: i32) -> (i32, i32) {
    %c0_i32 = arith.constant 0 : i32
    %c0_i32_0 = arith.constant 0 : i32
    %c0_i32_1 = arith.constant 0 : i32
    return %c0_i32, %c0_i32_0 : i32, i32
  }
  func.func @transform_12(%arg0: i32) -> (i32, i32) {
    %c0_i32 = arith.constant 0 : i32
    %c0_i32_0 = arith.constant 0 : i32
    %c0_i32_1 = arith.constant 0 : i32
    return %c0_i32, %c0_i32_0 : i32, i32
  }
  func.func @transform_13(%arg0: i32) -> (i32, i32) {
    %c0_i32 = arith.constant 0 : i32
    %c0_i32_0 = arith.constant 0 : i32
    %c0_i32_1 = arith.constant 0 : i32
    return %c0_i32, %c0_i32_0 : i32, i32
  }
  func.func @transform_14(%arg0: i32) -> (i32, i32) {
    %c0_i32 = arith.constant 0 : i32
    %c0_i32_0 = arith.constant 0 : i32
    %c0_i32_1 = arith.constant 0 : i32
    return %c0_i32, %c0_i32_0 : i32, i32
  }
  func.func @transform_15(%arg0: i32) -> (i32, i32) {
    %c0_i32 = arith.constant 0 : i32
    %c0_i32_0 = arith.constant 0 : i32
    %c0_i32_1 = arith.constant 0 : i32
    return %c0_i32, %c0_i32_0 : i32, i32
  }
  func.func @transform_16(%arg0: i32) -> (i32, i32) {
    %c0_i32 = arith.constant 0 : i32
    %c0_i32_0 = arith.constant 0 : i32
    %c0_i32_1 = arith.constant 0 : i32
    return %c0_i32, %c0_i32_0 : i32, i32
  }
  func.func @transform_17(%arg0: i32) -> (i32, i32) {
    %c0_i32 = arith.constant 0 : i32
    %c0_i32_0 = arith.constant 0 : i32
    %c0_i32_1 = arith.constant 0 : i32
    return %c0_i32, %c0_i32_0 : i32, i32
  }
  func.func @transform_18(%arg0: i32) -> (i32, i32) {
    %c0_i32 = arith.constant 0 : i32
    %c0_i32_0 = arith.constant 0 : i32
    return %c0_i32, %arg0 : i32, i32
  }
}

</mosaic_0001>

<llo_original>
// kernel: tpu_custom_call.1
$region0: #{tpu_custom_call.1}
  #allocation0 [shape = 'u32[]', space=smem, size = 0x4, offset = 0x4, fixed_abs, tag = 'smem constant byte address 0x4 - core index']
  #allocation1 [shape = 'u32[72,128]{1,0:T(1,128)}', space=vmem, size = 0x9000, scoped, tag = 'internal scratch']
  #allocation2 [shape = 'f32[1,1]{1,0:T(1,128)S(1)}', space=vmem, size = 0x200, scoped, tag = 'scoped memory for tpu_custom_call.1']
  %s0 = inlined_call_operand.vmem [shape: s32[2,128], index: 0, kind: input, shape index: {}]
  %s1 = inlined_call_operand.vmem [shape: f32[5,128], index: 1, kind: input, shape index: {}]
  %s2 = inlined_call_operand.vmem [shape: f32[5,1], index: 2, kind: input, shape index: {}]
  %s3 = inlined_call_operand.vmem [shape: f32[5,1], index: 3, kind: input, shape index: {}]
  %s4 = inlined_call_operand.vmem [shape: f32[4,10], index: 4, kind: input, shape index: {}]
  %s5 = inlined_call_operand.vmem [shape: f32[3,8], index: 5, kind: input, shape index: {}]
  %s6 = inlined_call_operand.vmem [shape: f32[32,4], index: 6, kind: input, shape index: {}]
  %s7 = inlined_call_operand.vmem [shape: f32[32,3], index: 7, kind: input, shape index: {}]
  %s8 = inlined_call_operand.vmem [shape: f32[32,5], index: 8, kind: input, shape index: {}]
  %s9 = inlined_call_operand.vmem [shape: f32[32,1], index: 9, kind: input, shape index: {}]
  %s10 = inlined_call_operand.vmem [shape: f32[32,1], index: 10, kind: input, shape index: {}]
  %s11 = inlined_call_operand.vmem [shape: f32[32,1], index: 11, kind: input, shape index: {}]
  %s12 = inlined_call_operand.vmem [shape: f32[16,32], index: 12, kind: input, shape index: {}]
  %s13 = inlined_call_operand.vmem [shape: f32[16,1], index: 13, kind: input, shape index: {}]
  %s14 = inlined_call_operand.vmem [shape: f32[16,1], index: 14, kind: input, shape index: {}]
  %s15 = inlined_call_operand.vmem [shape: f32[16,1], index: 15, kind: input, shape index: {}]
  %s16 = inlined_call_operand.vmem [shape: f32[16,1], index: 16, kind: input, shape index: {}]
  %s17 = inlined_call_operand.<no memory space> [shape: f32[1,1], index: 17, kind: input, shape index: {}]
  %s18 = inlined_call_operand.hbm [shape: f32[1,128], index: 18, kind: output, shape index: {}]
  %s19 = sld [smem:[#allocation0]]
  $region82: #{tpu_custom_call.1} parent=0
    _
  %s21 = ssub.s32 1, %s19
  %s22 = scalar_select 0, %s21, %s19
  %v23 = vstv %s17
  %24 = vst [vmem:[#allocation2] sm:$0x1] %v23
  $region1: #{tpu_custom_call.1} parent=0
    #allocation3 [shape = 'u8[512]{0}', space=vmem, size = 0x400, scoped, tag = 'output window, operand 0, single buffered']
    #allocation4 [shape = 's32[1]{0}', space=sflag, size = 0x4, scoped, tag = 'scoped memory for tpu_custom_call.1']
    %25 = vsyncpa [#allocation4], 0
    // Predicated region
    $region2: #{tpu_custom_call.1} parent=1 // pred_check
      _
    $region3: #{tpu_custom_call.1} parent=1 // pred_check_branch
      %27 = sbr.rel (0) target = $region5
    $region4: #{tpu_custom_call.1} parent=1 // pred_region
      _
    $region5: #{tpu_custom_call.1} parent=1 // pred_fallthru
      _
    // Predicated region
    $region6: #{tpu_custom_call.1} parent=1 // pred_check
      _
    $region7: #{tpu_custom_call.1} parent=1 // pred_check_branch
      %29 = sbr.rel (0) target = $region9
    $region8: #{tpu_custom_call.1} parent=1 // pred_region
      _
    $region9: #{tpu_custom_call.1} parent=1 // pred_fallthru
      _
    // Predicated region
    $region10: #{tpu_custom_call.1} parent=1 // pred_check
      _
    $region11: #{tpu_custom_call.1} parent=1 // pred_check_branch
      %31 = sbr.rel (0) target = $region13
    $region12: #{tpu_custom_call.1} parent=1 // pred_region
      _
    $region13: #{tpu_custom_call.1} parent=1 // pred_fallthru
      _
    // Predicated region
    $region14: #{tpu_custom_call.1} parent=1 // pred_check
      _
    $region15: #{tpu_custom_call.1} parent=1 // pred_check_branch
      %33 = sbr.rel (0) target = $region17
    $region16: #{tpu_custom_call.1} parent=1 // pred_region
      _
    $region17: #{tpu_custom_call.1} parent=1 // pred_fallthru
      _
    // Predicated region
    $region18: #{tpu_custom_call.1} parent=1 // pred_check
      _
    $region19: #{tpu_custom_call.1} parent=1 // pred_check_branch
      %35 = sbr.rel (0) target = $region21
    $region20: #{tpu_custom_call.1} parent=1 // pred_region
      _
    $region21: #{tpu_custom_call.1} parent=1 // pred_fallthru
      _
    // Predicated region
    $region22: #{tpu_custom_call.1} parent=1 // pred_check
      _
    $region23: #{tpu_custom_call.1} parent=1 // pred_check_branch
      %37 = sbr.rel (0) target = $region25
    $region24: #{tpu_custom_call.1} parent=1 // pred_region
      _
    $region25: #{tpu_custom_call.1} parent=1 // pred_fallthru
      _
    // Predicated region
    $region26: #{tpu_custom_call.1} parent=1 // pred_check
      _
    $region27: #{tpu_custom_call.1} parent=1 // pred_check_branch
      %39 = sbr.rel (0) target = $region29
    $region28: #{tpu_custom_call.1} parent=1 // pred_region
      _
    $region29: #{tpu_custom_call.1} parent=1 // pred_fallthru
      _
    // Predicated region
    $region30: #{tpu_custom_call.1} parent=1 // pred_check
      _
    $region31: #{tpu_custom_call.1} parent=1 // pred_check_branch
      %41 = sbr.rel (0) target = $region33
    $region32: #{tpu_custom_call.1} parent=1 // pred_region
      _
    $region33: #{tpu_custom_call.1} parent=1 // pred_fallthru
      _
    // Predicated region
    $region34: #{tpu_custom_call.1} parent=1 // pred_check
      _
    $region35: #{tpu_custom_call.1} parent=1 // pred_check_branch
      %43 = sbr.rel (0) target = $region37
    $region36: #{tpu_custom_call.1} parent=1 // pred_region
      _
    $region37: #{tpu_custom_call.1} parent=1 // pred_fallthru
      _
    // Predicated region
    $region38: #{tpu_custom_call.1} parent=1 // pred_check
      _
    $region39: #{tpu_custom_call.1} parent=1 // pred_check_branch
      %45 = sbr.rel (0) target = $region41
    $region40: #{tpu_custom_call.1} parent=1 // pred_region
      _
    $region41: #{tpu_custom_call.1} parent=1 // pred_fallthru
      _
    // Predicated region
    $region42: #{tpu_custom_call.1} parent=1 // pred_check
      _
    $region43: #{tpu_custom_call.1} parent=1 // pred_check_branch
      %47 = sbr.rel (0) target = $region45
    $region44: #{tpu_custom_call.1} parent=1 // pred_region
      _
    $region45: #{tpu_custom_call.1} parent=1 // pred_fallthru
      _
    // Predicated region
    $region46: #{tpu_custom_call.1} parent=1 // pred_check
      _
    $region47: #{tpu_custom_call.1} parent=1 // pred_check_branch
      %49 = sbr.rel (0) target = $region49
    $region48: #{tpu_custom_call.1} parent=1 // pred_region
      _
    $region49: #{tpu_custom_call.1} parent=1 // pred_fallthru
      _
    // Predicated region
    $region50: #{tpu_custom_call.1} parent=1 // pred_check
      _
    $region51: #{tpu_custom_call.1} parent=1 // pred_check_branch
      %51 = sbr.rel (0) target = $region53
    $region52: #{tpu_custom_call.1} parent=1 // pred_region
      _
    $region53: #{tpu_custom_call.1} parent=1 // pred_fallthru
      _
    // Predicated region
    $region54: #{tpu_custom_call.1} parent=1 // pred_check
      _
    $region55: #{tpu_custom_call.1} parent=1 // pred_check_branch
      %53 = sbr.rel (0) target = $region57
    $region56: #{tpu_custom_call.1} parent=1 // pred_region
      _
    $region57: #{tpu_custom_call.1} parent=1 // pred_fallthru
      _
    // Predicated region
    $region58: #{tpu_custom_call.1} parent=1 // pred_check
      _
    $region59: #{tpu_custom_call.1} parent=1 // pred_check_branch
      %55 = sbr.rel (0) target = $region61
    $region60: #{tpu_custom_call.1} parent=1 // pred_region
      _
    $region61: #{tpu_custom_call.1} parent=1 // pred_fallthru
      _
    // Predicated region
    $region62: #{tpu_custom_call.1} parent=1 // pred_check
      _
    $region63: #{tpu_custom_call.1} parent=1 // pred_check_branch
      %57 = sbr.rel (0) target = $region65
    $region64: #{tpu_custom_call.1} parent=1 // pred_region
      _
    $region65: #{tpu_custom_call.1} parent=1 // pred_fallthru
      _
    // Predicated region
    $region66: #{tpu_custom_call.1} parent=1 // pred_check
      _
    $region67: #{tpu_custom_call.1} parent=1 // pred_check_branch
      %59 = sbr.rel (0) target = $region69
    $region68: #{tpu_custom_call.1} parent=1 // pred_region
      _
    $region69: #{tpu_custom_call.1} parent=1 // pred_fallthru
      _
    // Predicated region
    $region70: #{tpu_custom_call.1} parent=1 // pred_check
      _
    $region71: #{tpu_custom_call.1} parent=1 // pred_check_branch
      %61 = sbr.rel (0) target = $region73
    $region72: #{tpu_custom_call.1} parent=1 // pred_region
      _
    $region73: #{tpu_custom_call.1} parent=1 // pred_fallthru
      _
    %v62 = vld [vmem:[%s9] sm:$0xff]
    %v63 = vld [vmem:[%s9 + $0x8] sm:$0xff]
    %v64 = vld [vmem:[%s9 + $0x10] sm:$0xff]
    %v65 = vld [vmem:[%s9 + $0x18] sm:$0xff]
    %v66 = vld [vmem:[%s0] sm:$0x1]
    %v67 = vlaneseq
    %v68 = vshrl.u32 %v67, 7
    %v69 = vadd.s32 %v68, 8
    %v70 = vperm.slane %v66, 0
    %vm71 = vcmp.eq.s32.totalorder %v68, %v70
    %vm72 = vcmp.eq.s32.totalorder %v69, %v70
    %v73 = vsel %vm71, 1, 0
    %v74 = vsel %vm72, 1, 0
    %v75 = vcvt.s32.f32 %v73
    %v76 = vcvt.s32.f32 %v74
    %v77 = vld [vmem:[%s4] sm:$0xf]
    %vm78 = vcmask 80896
    %v80 = vsel %vm78, %v77, 0
    %vm82 = vcmask 1041408
    %v84 = vsel %vm82, %v76, 0
    %86 = vmatpush.msra.mxu0 0.0
    %87 = vmatpush.msra.mxu0 0.0
    %88 = vmatpush.msra.mxu0 0.0
    %89 = vmatpush.msra.mxu0 0.0
    %90 = vmatpush.msra.mxu0 0.0
    %91 = vmatpush.msra.mxu0 0.0
    %92 = vmatpush.msra.mxu0 0.0
    %93 = vmatpush.msra.mxu0 0.0
    %94 = vmatpush.msra.mxu0 0.0
    %95 = vmatpush.msra.mxu0 0.0
    %96 = vmatpush.msra.mxu0 0.0
    %97 = vmatpush.msra.mxu0 0.0
    %98 = vmatpush.msra.mxu0 0.0
    %99 = vmatpush.msra.mxu0 0.0
    %100 = vmatpush.msra.mxu0 %v84
    %101 = vmatpush.msra.mxu0 %v75
    %102 = vmatmul.f32.gmra.mxu0 %v80
    %v103 = vpop.f32.mrf.mxu0
    %v104 = vadd.f32 0.0, %v103
    %105 = vdwg.mxu0
    %v106 = vld [vmem:[%s6] sm:$0xff]
    %v107 = vld [vmem:[%s6 + $0x8] sm:$0xff]
    %v108 = vld [vmem:[%s6 + $0x10] sm:$0xff]
    %v109 = vld [vmem:[%s6 + $0x18] sm:$0xff]
    %vm110 = vcmask 31744
    %v112 = vsel %vm110, %v106, 0
    %v115 = vsel %vm110, %v107, 0
    %v118 = vsel %vm110, %v108, 0
    %v121 = vsel %vm110, %v109, 0
    %vm123 = vcmask 1043456
    %v125 = vsel %vm123, %v104, 0
    %127 = vmatpush.msra.mxu0 0.0
    %128 = vmatpush.msra.mxu0 0.0
    %129 = vmatpush.msra.mxu0 0.0
    %130 = vmatpush.msra.mxu0 0.0
    %131 = vmatpush.msra.mxu0 0.0
    %132 = vmatpush.msra.mxu0 0.0
    %133 = vmatpush.msra.mxu0 0.0
    %134 = vmatpush.msra.mxu0 0.0
    %135 = vmatpush.msra.mxu0 0.0
    %136 = vmatpush.msra.mxu0 0.0
    %137 = vmatpush.msra.mxu0 0.0
    %138 = vmatpush.msra.mxu0 0.0
    %139 = vmatpush.msra.mxu0 0.0
    %140 = vmatpush.msra.mxu0 0.0
    %141 = vmatpush.msra.mxu0 0.0
    %142 = vmatpush.msra.mxu0 %v125
    %143 = vmatmul.f32.gmra.mxu0 %v112
    %v144 = vpop.f32.mrf.mxu0
    %v145 = vadd.f32 0.0, %v144
    %146 = vmatmul.f32.gmra.mxu0 %v115
    %v147 = vpop.f32.mrf.mxu0
    %v148 = vadd.f32 0.0, %v147
    %149 = vmatmul.f32.gmra.mxu0 %v118
    %v150 = vpop.f32.mrf.mxu0
    %v151 = vadd.f32 0.0, %v150
    %152 = vmatmul.f32.gmra.mxu0 %v121
    %v153 = vpop.f32.mrf.mxu0
    %v154 = vadd.f32 0.0, %v153
    %155 = vdwg.mxu0
    %157 = vset.pattern.permute.xlu0 0
    %158 = vperm.xlu0 %157, %v62
    %v159 = vpop.permute.xlu0 %158
    %162 = vset.pattern.permute.xlu0 0
    %163 = vperm.xlu0 %162, %v63
    %v164 = vpop.permute.xlu0 %163
    %167 = vset.pattern.permute.xlu0 0
    %168 = vperm.xlu0 %167, %v64
    %v169 = vpop.permute.xlu0 %168
    %172 = vset.pattern.permute.xlu0 0
    %173 = vperm.xlu0 %172, %v65
    %v174 = vpop.permute.xlu0 %173
    %v176 = vadd.f32 %v159, %v145
    %v177 = vadd.f32 %v164, %v148
    %v178 = vadd.f32 %v169, %v151
    %v179 = vadd.f32 %v174, %v154
    %v180 = vld [vmem:[%s0 + $0x1] sm:$0x1]
    %v181 = vperm.slane %v180, 0
    %vm182 = vcmp.eq.s32.totalorder %v68, %v181
    %v183 = vsel %vm182, 1, 0
    %v184 = vcvt.s32.f32 %v183
    %v185 = vld [vmem:[%s5] sm:$0x7]
    %vm186 = vcmask 64512
    %v188 = vsel %vm186, %v185, 0
    %190 = vmatpush.msra.mxu0 0.0
    %191 = vmatpush.msra.mxu0 0.0
    %192 = vmatpush.msra.mxu0 0.0
    %193 = vmatpush.msra.mxu0 0.0
    %194 = vmatpush.msra.mxu0 0.0
    %195 = vmatpush.msra.mxu0 0.0
    %196 = vmatpush.msra.mxu0 0.0
    %197 = vmatpush.msra.mxu0 0.0
    %198 = vmatpush.msra.mxu0 0.0
    %199 = vmatpush.msra.mxu0 0.0
    %200 = vmatpush.msra.mxu0 0.0
    %201 = vmatpush.msra.mxu0 0.0
    %202 = vmatpush.msra.mxu0 0.0
    %203 = vmatpush.msra.mxu0 0.0
    %204 = vmatpush.msra.mxu0 0.0
    %205 = vmatpush.msra.mxu0 %v184
    %206 = vmatmul.f32.gmra.mxu0 %v188
    %v207 = vpop.f32.mrf.mxu0
    %v208 = vadd.f32 0.0, %v207
    %209 = vdwg.mxu0
    %v210 = vld [vmem:[%s7] sm:$0xff]
    %v211 = vld [vmem:[%s7 + $0x8] sm:$0xff]
    %v212 = vld [vmem:[%s7 + $0x10] sm:$0xff]
    %v213 = vld [vmem:[%s7 + $0x18] sm:$0xff]
    %vm214 = vcmask 23552
    %v216 = vsel %vm214, %v210, 0
    %v219 = vsel %vm214, %v211, 0
    %v222 = vsel %vm214, %v212, 0
    %v225 = vsel %vm214, %v213, 0
    %vm227 = vcmask 1042432
    %v229 = vsel %vm227, %v208, 0
    %231 = vmatpush.msra.mxu0 0.0
    %232 = vmatpush.msra.mxu0 0.0
    %233 = vmatpush.msra.mxu0 0.0
    %234 = vmatpush.msra.mxu0 0.0
    %235 = vmatpush.msra.mxu0 0.0
    %236 = vmatpush.msra.mxu0 0.0
    %237 = vmatpush.msra.mxu0 0.0
    %238 = vmatpush.msra.mxu0 0.0
    %239 = vmatpush.msra.mxu0 0.0
    %240 = vmatpush.msra.mxu0 0.0
    %241 = vmatpush.msra.mxu0 0.0
    %242 = vmatpush.msra.mxu0 0.0
    %243 = vmatpush.msra.mxu0 0.0
    %244 = vmatpush.msra.mxu0 0.0
    %245 = vmatpush.msra.mxu0 0.0
    %246 = vmatpush.msra.mxu0 %v229
    %247 = vmatmul.f32.gmra.mxu0 %v216
    %v248 = vpop.f32.mrf.mxu0
    %v249 = vadd.f32 0.0, %v248
    %250 = vmatmul.f32.gmra.mxu0 %v219
    %v251 = vpop.f32.mrf.mxu0
    %v252 = vadd.f32 0.0, %v251
    %253 = vmatmul.f32.gmra.mxu0 %v222
    %v254 = vpop.f32.mrf.mxu0
    %v255 = vadd.f32 0.0, %v254
    %256 = vmatmul.f32.gmra.mxu0 %v225
    %v257 = vpop.f32.mrf.mxu0
    %v258 = vadd.f32 0.0, %v257
    %259 = vdwg.mxu0
    %v260 = vadd.f32 %v176, %v249
    %v261 = vadd.f32 %v177, %v252
    %v262 = vadd.f32 %v178, %v255
    %v263 = vadd.f32 %v179, %v258
    %v264 = vld [vmem:[%s1] sm:$0x1f]
    %v265 = vld [vmem:[%s2] sm:$0x1f]
    %267 = vset.pattern.permute.xlu0 0
    %268 = vperm.xlu0 %267, %v265
    %v269 = vpop.permute.xlu0 %268
    %v271 = vmul.f32 %v264, %v269
    %v272 = vld [vmem:[%s3] sm:$0x1f]
    %274 = vset.pattern.permute.xlu0 0
    %275 = vperm.xlu0 %274, %v272
    %v276 = vpop.permute.xlu0 %275
    %v278 = vadd.f32 %v271, %v276
    %v279 = vld [vmem:[%s8] sm:$0xff]
    %v280 = vld [vmem:[%s8 + $0x8] sm:$0xff]
    %v281 = vld [vmem:[%s8 + $0x10] sm:$0xff]
    %v282 = vld [vmem:[%s8 + $0x18] sm:$0xff]
    %vm283 = vcmask 39936
    %v285 = vsel %vm283, %v279, 0
    %v288 = vsel %vm283, %v280, 0
    %v291 = vsel %vm283, %v281, 0
    %v294 = vsel %vm283, %v282, 0
    %vm296 = vcmask 1044480
    %v298 = vsel %vm296, %v278, 0
    %300 = vmatpush.msra.mxu0 0.0
    %301 = vmatpush.msra.mxu0 0.0
    %302 = vmatpush.msra.mxu0 0.0
    %303 = vmatpush.msra.mxu0 0.0
    %304 = vmatpush.msra.mxu0 0.0
    %305 = vmatpush.msra.mxu0 0.0
    %306 = vmatpush.msra.mxu0 0.0
    %307 = vmatpush.msra.mxu0 0.0
    %308 = vmatpush.msra.mxu0 0.0
    %309 = vmatpush.msra.mxu0 0.0
    %310 = vmatpush.msra.mxu0 0.0
    %311 = vmatpush.msra.mxu0 0.0
    %312 = vmatpush.msra.mxu0 0.0
    %313 = vmatpush.msra.mxu0 0.0
    %314 = vmatpush.msra.mxu0 0.0
    %315 = vmatpush.msra.mxu0 %v298
    %316 = vmatmul.f32.gmra.mxu0 %v285
    %v317 = vpop.f32.mrf.mxu0
    %v318 = vadd.f32 0.0, %v317
    %319 = vmatmul.f32.gmra.mxu0 %v288
    %v320 = vpop.f32.mrf.mxu0
    %v321 = vadd.f32 0.0, %v320
    %322 = vmatmul.f32.gmra.mxu0 %v291
    %v323 = vpop.f32.mrf.mxu0
    %v324 = vadd.f32 0.0, %v323
    %325 = vmatmul.f32.gmra.mxu0 %v294
    %v326 = vpop.f32.mrf.mxu0
    %v327 = vadd.f32 0.0, %v326
    %328 = vdwg.mxu0
    %v329 = vadd.f32 %v260, %v318
    %v330 = vadd.f32 %v261, %v321
    %v331 = vadd.f32 %v262, %v324
    %v332 = vadd.f32 %v263, %v327
    %v333 = vmax.f32 %v329, 0.0
    %v334 = vmax.f32 %v330, 0.0
    %v335 = vmax.f32 %v331, 0.0
    %v336 = vmax.f32 %v332, 0.0
    %v337 = vld [vmem:[%s10] sm:$0xff]
    %v338 = vld [vmem:[%s10 + $0x8] sm:$0xff]
    %v339 = vld [vmem:[%s10 + $0x10] sm:$0xff]
    %v340 = vld [vmem:[%s10 + $0x18] sm:$0xff]
    %342 = vset.pattern.permute.xlu0 0
    %343 = vperm.xlu0 %342, %v337
    %v344 = vpop.permute.xlu0 %343
    %347 = vset.pattern.permute.xlu0 0
    %348 = vperm.xlu0 %347, %v338
    %v349 = vpop.permute.xlu0 %348
    %352 = vset.pattern.permute.xlu0 0
    %353 = vperm.xlu0 %352, %v339
    %v354 = vpop.permute.xlu0 %353
    %357 = vset.pattern.permute.xlu0 0
    %358 = vperm.xlu0 %357, %v340
    %v359 = vpop.permute.xlu0 %358
    %v361 = vmul.f32 %v333, %v344
    %v362 = vmul.f32 %v334, %v349
    %v363 = vmul.f32 %v335, %v354
    %v364 = vmul.f32 %v336, %v359
    %v365 = vld [vmem:[%s11] sm:$0xff]
    %v366 = vld [vmem:[%s11 + $0x8] sm:$0xff]
    %v367 = vld [vmem:[%s11 + $0x10] sm:$0xff]
    %v368 = vld [vmem:[%s11 + $0x18] sm:$0xff]
    %370 = vset.pattern.permute.xlu0 0
    %371 = vperm.xlu0 %370, %v365
    %v372 = vpop.permute.xlu0 %371
    %375 = vset.pattern.permute.xlu0 0
    %376 = vperm.xlu0 %375, %v366
    %v377 = vpop.permute.xlu0 %376
    %380 = vset.pattern.permute.xlu0 0
    %381 = vperm.xlu0 %380, %v367
    %v382 = vpop.permute.xlu0 %381
    %385 = vset.pattern.permute.xlu0 0
    %386 = vperm.xlu0 %385, %v368
    %v387 = vpop.permute.xlu0 %386
    %v389 = vadd.f32 %v361, %v372
    %v390 = vadd.f32 %v362, %v377
    %v391 = vadd.f32 %v363, %v382
    %v392 = vadd.f32 %v364, %v387
    %v393 = vld [vmem:[%s12] sm:$0xff]
    %v394 = vld [vmem:[%s12 + $0x8] sm:$0xff]
    %v395 = vld [vmem:[%s13] sm:$0xff]
    %v396 = vld [vmem:[%s13 + $0x8] sm:$0xff]
    %398 = vset.pattern.permute.xlu0 0
    %399 = vperm.xlu0 %398, %v395
    %v400 = vpop.permute.xlu0 %399
    %403 = vset.pattern.permute.xlu0 0
    %404 = vperm.xlu0 %403, %v396
    %v405 = vpop.permute.xlu0 %404
    %vm407 = vcmask 261120
    %v409 = vsel %vm407, %v393, 0
    %v412 = vsel %vm407, %v394, 0
    %414 = vmatpush.msra.mxu0 0.0
    %415 = vmatpush.msra.mxu0 0.0
    %416 = vmatpush.msra.mxu0 0.0
    %417 = vmatpush.msra.mxu0 0.0
    %418 = vmatpush.msra.mxu0 0.0
    %419 = vmatpush.msra.mxu0 0.0
    %420 = vmatpush.msra.mxu0 0.0
    %421 = vmatpush.msra.mxu0 0.0
    %422 = vmatpush.msra.mxu0 0.0
    %423 = vmatpush.msra.mxu0 0.0
    %424 = vmatpush.msra.mxu0 0.0
    %425 = vmatpush.msra.mxu0 0.0
    %426 = vmatpush.msra.mxu0 %v392
    %427 = vmatpush.msra.mxu0 %v391
    %428 = vmatpush.msra.mxu0 %v390
    %429 = vmatpush.msra.mxu0 %v389
    %430 = vmatmul.f32.gmra.mxu0 %v409
    %v431 = vpop.f32.mrf.mxu0
    %v432 = vadd.f32 %v400, %v431
    %433 = vmatmul.f32.gmra.mxu0 %v412
    %v434 = vpop.f32.mrf.mxu0
    %v435 = vadd.f32 %v405, %v434
    %436 = vdwg.mxu0
    %v437 = vmax.f32 %v432, 0.0
    %v438 = vmax.f32 %v435, 0.0
    %v439 = vld [vmem:[%s14] sm:$0xff]
    %v440 = vld [vmem:[%s14 + $0x8] sm:$0xff]
    %442 = vset.pattern.permute.xlu0 0
    %443 = vperm.xlu0 %442, %v439
    %v444 = vpop.permute.xlu0 %443
    %447 = vset.pattern.permute.xlu0 0
    %448 = vperm.xlu0 %447, %v440
    %v449 = vpop.permute.xlu0 %448
    %v451 = vmul.f32 %v437, %v444
    %v452 = vmul.f32 %v438, %v449
    %v453 = vld [vmem:[%s15] sm:$0xff]
    %v454 = vld [vmem:[%s15 + $0x8] sm:$0xff]
    %456 = vset.pattern.permute.xlu0 0
    %457 = vperm.xlu0 %456, %v453
    %v458 = vpop.permute.xlu0 %457
    %461 = vset.pattern.permute.xlu0 0
    %462 = vperm.xlu0 %461, %v454
    %v463 = vpop.permute.xlu0 %462
    %v465 = vadd.f32 %v451, %v458
    %v466 = vadd.f32 %v452, %v463
    %v467 = vld [vmem:[%s16] sm:$0xff]
    %v468 = vld [vmem:[%s16 + $0x8] sm:$0xff]
    %470 = vset.pattern.permute.xlu0 0
    %471 = vperm.xlu0 %470, %v467
    %v472 = vpop.permute.xlu0 %471
    %475 = vset.pattern.permute.xlu0 0
    %476 = vperm.xlu0 %475, %v468
    %v477 = vpop.permute.xlu0 %476
    %v479 = vmul.f32 %v472, %v465
    %v480 = vmul.f32 %v477, %v466
    %v481 = vadd.f32 %v479, %v480
    %v482 = vrot.slane %v481, 4
    %v483 = vadd.f32 %v481, %v482
    %v484 = vrot.slane %v483, 2
    %v485 = vadd.f32 %v483, %v484
    %v486 = vrot.slane %v485, 1
    %v487 = vadd.f32 %v485, %v486
    %v488 = vld [vmem:[#allocation2] sm:$0x1]
    %490 = vset.pattern.permute.xlu0 0
    %491 = vperm.xlu0 %490, %v488
    %v492 = vpop.permute.xlu0 %491
    %v494 = vperm.slane %v492, 0
    %v495 = vadd.f32 %v487, %v494
    %v496 = vxor.u32 %v495, 2147483648
    %v497 = vmul.f32 %v496, 1.442695
    %v498 = vpow.pop %v497
    %v499 = vadd.f32 %v498, 1.0
    %v500 = vrcp.pop %v499
    %v501 = vmul.f32 %v499, %v500
    %v502 = vsub.f32 1.0, %v501
    %v503 = vmul.f32 %v500, %v502
    %v504 = vadd.f32 %v500, %v503
    %vm505 = vweird.f32 %v499
    %vm506 = vweird.f32 %v500
    %vm507 = vmor %vm505, %vm506
    %v508 = vsel %vm507, %v500, %v504
    %v509 = vand.u32 2147483647, %v499
    %vm510 = vcmp.eq.f32.partialorder %v509, 8.507059e+37
    %v511 = vand.u32 %v499, 2147483648
    %v512 = vor.u32 1.1754944e-38, %v511
    %v513 = vsel %vm510, %v512, %v508
    %v514 = vmul.f32 1.0, %v513
    %515 = vst [vmem:[#allocation3] sm:$0x1] %v514
    // Predicated region
    $region74: #{tpu_custom_call.1} parent=1 // pred_check
      _
    $region75: #{tpu_custom_call.1} parent=1 // pred_check_branch
      %517 = sbr.rel (0) target = $region77
    $region76: #{tpu_custom_call.1} parent=1 // pred_region
      %519 = vsyncadd [#allocation4], 0
      %s521 = sshll.u32 [#allocation3], 4
      %s522 = int_to_ptr.vmem [resolvable:$true] %s521
      %s523 = sshll.u32 %s18, 4
      %s524 = int_to_ptr.hbm [resolvable:$true] %s523
      %526 = dma.vmem_to_hbm [thread:$0]  %s522, 16, %s524, [#allocation4]
    $region77: #{tpu_custom_call.1} parent=1 // pred_fallthru
      _
    // Predicated region
    $region78: #{tpu_custom_call.1} parent=1 // pred_check
      _
    $region79: #{tpu_custom_call.1} parent=1 // pred_check_branch
      %528 = sbr.rel (0) target = $region81
    $region80: #{tpu_custom_call.1} parent=1 // pred_region
      %530 = dma.done [#allocation4], 16
    $region81: #{tpu_custom_call.1} parent=1 // pred_fallthru
      _
    %531 = vsyncpa [#allocation4], 1

</llo_original>
